<compile_context>
chip_gen: v6e
topology: v6e:2x2x1
jax: 0.10.0
libtpu: 0.0.40
codegen_flags: <defaults>
</compile_context>

<pallas_src>
import functools
import math

import jax
import jax.numpy as jnp
from jax import lax
from jax.experimental import pallas as pl
from jax.experimental.pallas import tpu as pltpu


def _round_up(x, m):
    return ((x + m - 1) // m) * m


def _vmem_limit(nbytes):
    # Keep at least the default scoped limit; stay well under physical VMEM.
    return int(max(32 << 20, min(100 << 20, nbytes)))


# --------------------------------- kernels -----------------------------------

def _kv_proj_kernel(k_ref, v_ref, wq_ref, bq_ref, wv_ref, bv_ref, kp_ref, vp_ref):
    """Key/Value input projections -- hoisted out of the attention grid (done once)."""
    f32 = jnp.float32
    kp = jnp.dot(k_ref[...], wq_ref[...], preferred_element_type=f32) + bq_ref[...]
    vp = jnp.dot(v_ref[...], wv_ref[...], preferred_element_type=f32) + bv_ref[...]
    kp_ref[...] = kp.astype(kp_ref.dtype)
    vp_ref[...] = vp.astype(vp_ref.dtype)


def _mha_kernel(q_ref, kp_ref, vp_ref, wk_ref, bk_ref, wo_ref, bo_ref,
                o_ref, ctx_ref, *, num_heads, d_k, scale, n_kv_valid, approx_recip):
    f32 = jnp.float32
    compute_dtype = kp_ref.dtype
    n_kv = kp_ref.shape[0]

    # Query projection (module quirk: query is routed through linear_K).
    qp = jnp.dot(q_ref[...], wk_ref[...], preferred_element_type=f32) + bk_ref[...]
    # Fold 1/sqrt(d_k) into qp once: one (tm, d_model) multiply instead of
    # num_heads multiplies over (tm, n_kv) score tiles.
    qp = (qp * scale).astype(compute_dtype)

    kp = kp_ref[...]
    vp = vp_ref[...]

    # TODO(synk): for num_heads >= ~8 move this to lax.fori_loop (or a grid axis)
    # so per-head temporaries do not stay live and spill.
    for h in range(num_heads):
        sl = slice(h * d_k, (h + 1) * d_k)
        qh = qp[:, sl]                                           # (tm, d_k)
        kh = kp[:, sl]                                           # (n_kv, d_k)
        vh = vp[:, sl]                                           # (n_kv, d_k)

        # Q_h @ K_h^T without an explicit transpose; f32 accumulation on the MXU.
        s = lax.dot_general(qh, kh, (((1,), (1,)), ((), ())),
                            preferred_element_type=f32)          # (tm, n_kv)
        if n_kv_valid != n_kv:                                   # mask padded keys
            kv_idx = lax.broadcasted_iota(jnp.int32, (1, n_kv), 1)
            s = jnp.where(kv_idx < n_kv_valid, s, -1e30)

        # Unnormalized softmax; normalization deferred to the (tm, d_k) context:
        # VALU work shrinks ~n_kv/d_k and the reciprocal lands on the EUP slot.
        s = s - jnp.max(s, axis=-1, keepdims=True)
        p = jnp.exp(s)
        denom = jnp.sum(p, axis=-1, keepdims=True)
        ctx_h = jnp.dot(p.astype(compute_dtype), vh, preferred_element_type=f32)
        ctx_ref[:, sl] = ctx_h * pl.reciprocal(denom, approx=approx_recip)

    # One K=d_model output projection over the concatenated heads
    # (instead of num_heads K=d_k matmuls that waste MXU contraction depth).
    out = jnp.dot(ctx_ref[...].astype(compute_dtype), wo_ref[...],
                  preferred_element_type=f32) + bo_ref[...]
    o_ref[...] = out.astype(o_ref.dtype)


# --------------------------------- wrapper ------------------------------------

def multi_head_attention_forward(query, key, value, params, num_heads, mask=None,
                                 *, block_q=256, block_kv=512,
                                 compute_dtype=jnp.bfloat16):
    """query/key/value: (N, d_model). Returns (N, 1, d_model), matching the module."""
    del mask  # see TODO(synk) at top: the reference's masked_fill is a no-op.
    n, d_model = query.shape
    assert d_model % num_heads == 0
    d_k = d_model // num_heads
    scale = 1.0 / math.sqrt(d_k)
    n_kv = key.shape[0]
    f32 = jnp.float32
    cb = jnp.dtype(compute_dtype).itemsize
    approx_recip = bool(jnp.dtype(compute_dtype) != jnp.dtype(jnp.float32))

    # Weights pre-transposed to (in, out) so kernels compute x @ W + b; weights and
    # activations in `compute_dtype` (bf16 default), biases and accumulation in f32.
    wk_t = params["w_k"].T.astype(compute_dtype)
    wq_t = params["w_q"].T.astype(compute_dtype)
    wv_t = params["w_v"].T.astype(compute_dtype)
    wo_t = params["w_o"].T.astype(compute_dtype)
    bk = params["b_k"].reshape(1, d_model).astype(f32)
    bq = params["b_q"].reshape(1, d_model).astype(f32)
    bv = params["b_v"].reshape(1, d_model).astype(f32)
    bo = params["b_o"].reshape(1, d_model).astype(f32)

    # Constant block index -> fetched once, stays VMEM-resident across the grid.
    resident = lambda i: (0, 0)

    # ---- Pass 1: K/V projections, computed ONCE (hoisted out of the row grid). ----
    tkv = min(_round_up(n_kv, 8), block_kv)
    n_kv_pad = _round_up(n_kv, tkv)
    key_c = key.astype(compute_dtype)
    value_c = value.astype(compute_dtype)
    if n_kv_pad != n_kv:
        key_c = jnp.pad(key_c, ((0, n_kv_pad - n_kv), (0, 0)))
        value_c = jnp.pad(value_c, ((0, n_kv_pad - n_kv), (0, 0)))

    proj_flops = 2 * 2 * n_kv_pad * d_model * d_model
    proj_bytes = (4 * n_kv_pad * d_model * cb + 2 * d_model * d_model * cb
                  + 2 * d_model * 4)
    proj_vmem = _vmem_limit(int(1.5 * (
        2 * (2 * d_model * d_model * cb + 2 * d_model * 4)       # resident (x2 buf)
        + 2 * 4 * tkv * d_model * cb                             # in/out tiles (x2 buf)
        + 2 * tkv * d_model * 4)) + (2 << 20))                   # f32 intermediates

    kp, vp = pl.pallas_call(
        _kv_proj_kernel,
        out_shape=(jax.ShapeDtypeStruct((n_kv_pad, d_model), compute_dtype),
                   jax.ShapeDtypeStruct((n_kv_pad, d_model), compute_dtype)),
        grid=(n_kv_pad // tkv,),
        in_specs=[
            pl.BlockSpec((tkv, d_model), lambda i: (i, 0)),      # key rows
            pl.BlockSpec((tkv, d_model), lambda i: (i, 0)),      # value rows
            pl.BlockSpec((d_model, d_model), resident),          # W_Q^T
            pl.BlockSpec((1, d_model), resident),                # b_Q
            pl.BlockSpec((d_model, d_model), resident),          # W_V^T
            pl.BlockSpec((1, d_model), resident),                # b_V
        ],
        out_specs=(pl.BlockSpec((tkv, d_model), lambda i: (i, 0)),
                   pl.BlockSpec((tkv, d_model), lambda i: (i, 0))),
        compiler_params=pltpu.CompilerParams(
            dimension_semantics=("parallel",), vmem_limit_bytes=proj_vmem),
        cost_estimate=pl.CostEstimate(flops=int(proj_flops), transcendentals=0,
                                      bytes_accessed=int(proj_bytes)),
    )(key_c, value_c, wq_t, bq, wv_t, bv)

    # ---- Pass 2: fused q-projection + attention + output projection. ----
    tm = min(_round_up(n, 8), block_q)
    n_pad = _round_up(n, tm)
    q_c = query.astype(compute_dtype)
    if n_pad != n:
        q_c = jnp.pad(q_c, ((0, n_pad - n), (0, 0)))
    grid = (n_pad // tm,)

    kernel = functools.partial(_mha_kernel, num_heads=num_heads, d_k=d_k,
                               scale=scale, n_kv_valid=n_kv,
                               approx_recip=approx_recip)

    attn_flops = (2 * n_pad * d_model * d_model                  # q projection
                  + num_heads * 2 * 2 * n_pad * n_kv_pad * d_k   # scores + p @ V
                  + 2 * n_pad * d_model * d_model)               # output projection
    attn_bytes = (n_pad * d_model * cb + 2 * n_kv_pad * d_model * cb
                  + 2 * d_model * d_model * cb + 2 * d_model * 4
                  + n_pad * d_model * 4)
    attn_vmem = _vmem_limit(int(1.5 * (
        2 * (2 * d_model * d_model * cb + 2 * n_kv_pad * d_model * cb
             + 2 * d_model * 4)                                  # resident (x2 buf)
        + 2 * tm * d_model * (cb + 4)                            # q/out tiles (x2 buf)
        + tm * d_model * 4                                       # ctx scratch
        + 3 * tm * d_model * 4 + 2 * tm * n_kv_pad * 4)) + (2 << 20))

    out = pl.pallas_call(
        kernel,
        out_shape=jax.ShapeDtypeStruct((n_pad, d_model), query.dtype),
        grid=grid,
        in_specs=[
            pl.BlockSpec((tm, d_model), lambda i: (i, 0)),       # query row tile
            pl.BlockSpec((n_kv_pad, d_model), resident),         # projected K (resident)
            pl.BlockSpec((n_kv_pad, d_model), resident),         # projected V (resident)
            pl.BlockSpec((d_model, d_model), resident),          # W_K^T (q projection)
            pl.BlockSpec((1, d_model), resident),                # b_K
            pl.BlockSpec((d_model, d_model), resident),          # W_O^T
            pl.BlockSpec((1, d_model), resident),                # b_O
        ],
        out_specs=pl.BlockSpec((tm, d_model), lambda i: (i, 0)),
        scratch_shapes=[pltpu.VMEM((tm, d_model), jnp.float32)], # concatenated-head ctx
        compiler_params=pltpu.CompilerParams(
            dimension_semantics=("parallel",), vmem_limit_bytes=attn_vmem),
        cost_estimate=pl.CostEstimate(
            flops=int(attn_flops),
            transcendentals=int(num_heads * n_pad * n_kv_pad),
            bytes_accessed=int(attn_bytes)),
    )(q_c, kp, vp, wk_t, bk, wo_t, bo)

    out = out[:n]
    # Match the PyTorch module's output shape: (nbatches, 1, d_model).
    return out.reshape(n, 1, d_model)


# ----------------------------- reference & setup ------------------------------

def init_params(key, d_model):
    """PyTorch nn.Linear-style init: U(-1/sqrt(in), 1/sqrt(in)); W stored as (out, in)."""
    bound = 1.0 / math.sqrt(d_model)
    ks = jax.random.split(key, 8)

    def linear(kw, kb):
        w = jax.random.uniform(kw, (d_model, d_model), jnp.float32, -bound, bound)
        b = jax.random.uniform(kb, (d_model,), jnp.float32, -bound, bound)
        return w, b

    w_k, b_k = linear(ks[0], ks[1])
    w_q, b_q = linear(ks[2], ks[3])
    w_v, b_v = linear(ks[4], ks[5])
    w_o, b_o = linear(ks[6], ks[7])
    return {"w_k": w_k, "b_k": b_k, "w_q": w_q, "b_q": b_q,
            "w_v": w_v, "b_v": b_v, "w_o": w_o, "b_o": b_o}


def mha_reference(query, key, value, params, num_heads):
    """Pure-JAX transcription of the PyTorch forward (eval mode)."""
    n, d_model = query.shape
    d_k = d_model // num_heads
    pq = query @ params["w_k"].T + params["b_k"]
    pk = key @ params["w_q"].T + params["b_q"]
    pv = value @ params["w_v"].T + params["b_v"]
    mhq = pq.reshape(n, num_heads, d_k).transpose(1, 0, 2)
    mhk = pk.reshape(n, num_heads, d_k).transpose(1, 0, 2)
    mhv = pv.reshape(n, num_heads, d_k).transpose(1, 0, 2)
    s = jnp.einsum("hid,hjd->hij", mhq, mhk) / math.sqrt(d_k)
    w = jax.nn.softmax(s, axis=-1)
    av = jnp.einsum("hij,hjd->hid", w, mhv)
    av = av.transpose(1, 0, 2).reshape(n, num_heads * d_k)
    out = av @ params["w_o"].T + params["b_o"]
    return out.reshape(n, 1, d_model)


if __name__ == "__main__":
    num_heads, d_model = 4, 32
    nbatches = 8  # the module treats the batch axis as the "sentence" axis

    key0 = jax.random.PRNGKey(0)
    k_par, k_q, k_k, k_v = jax.random.split(key0, 4)
    params = init_params(k_par, d_model)

    query = jax.random.normal(k_q, (nbatches, d_model), dtype=jnp.float32)
    key_in = jax.random.normal(k_k, (nbatches, d_model), dtype=jnp.float32)
    value = jax.random.normal(k_v, (nbatches, d_model), dtype=jnp.float32)

    ref = mha_reference(query, key_in, value, params, num_heads)

    # Production config: bf16 MXU operands, f32 accumulation (loose bf16 tolerance).
    out_bf16 = multi_head_attention_forward(query, key_in, value, params, num_heads)
    out_bf16 = jax.block_until_ready(out_bf16)
    assert out_bf16.shape == (nbatches, 1, d_model)
    assert jnp.allclose(out_bf16, ref, atol=5e-2, rtol=5e-2), \
        float(jnp.max(jnp.abs(out_bf16 - ref)))

    # Full-f32 path for a tight numerical check of the kernel structure itself.
    out_f32 = multi_head_attention_forward(query, key_in, value, params, num_heads,
                                           compute_dtype=jnp.float32)
    out_f32 = jax.block_until_ready(out_f32)
    assert out_f32.shape == (nbatches, 1, d_model)
    assert jnp.allclose(out_f32, ref, atol=2e-5, rtol=2e-5), \
        float(jnp.max(jnp.abs(out_f32 - ref)))

    print("KERNEL_OK")
</pallas_src>

<mosaic_0001>
module attributes {stable_mosaic.version = 11 : i64} {
  func.func @_kv_proj_kernel(%arg0: i32, %arg1: memref<8x32xbf16, #tpu.memory_space<vmem>>, %arg2: memref<8x32xbf16, #tpu.memory_space<vmem>>, %arg3: memref<32x32xbf16, #tpu.memory_space<vmem>>, %arg4: memref<1x32xf32, #tpu.memory_space<vmem>>, %arg5: memref<32x32xbf16, #tpu.memory_space<vmem>>, %arg6: memref<1x32xf32, #tpu.memory_space<vmem>>, %arg7: memref<8x32xbf16, #tpu.memory_space<vmem>>, %arg8: memref<8x32xbf16, #tpu.memory_space<vmem>>) attributes {dimension_semantics = [#tpu.dimension_semantics<parallel>], iteration_bounds = array<i64: 1>, scalar_prefetch = 0 : i64, scratch_operands = 0 : i64, tpu.core_type = #tpu.core_type<tc>, window_params = [{transform_indices = @transform_0, window_bounds = array<i64: 8, 32>}, {transform_indices = @transform_1, window_bounds = array<i64: 8, 32>}, {pipeline_mode = #tpu.pipeline_mode<synchronous>, transform_indices = @transform_2, window_bounds = array<i64: 32, 32>}, {pipeline_mode = #tpu.pipeline_mode<synchronous>, transform_indices = @transform_3, window_bounds = array<i64: 1, 32>}, {pipeline_mode = #tpu.pipeline_mode<synchronous>, transform_indices = @transform_4, window_bounds = array<i64: 32, 32>}, {pipeline_mode = #tpu.pipeline_mode<synchronous>, transform_indices = @transform_5, window_bounds = array<i64: 1, 32>}, {transform_indices = @transform_6, window_bounds = array<i64: 8, 32>}, {transform_indices = @transform_7, window_bounds = array<i64: 8, 32>}]} {
    %c0 = arith.constant 0 : index
    %c0_0 = arith.constant 0 : index
    %0 = vector.load %arg1[%c0, %c0_0] : memref<8x32xbf16, #tpu.memory_space<vmem>>, vector<8x32xbf16>
    %c0_1 = arith.constant 0 : index
    %c0_2 = arith.constant 0 : index
    %1 = vector.load %arg3[%c0_1, %c0_2] : memref<32x32xbf16, #tpu.memory_space<vmem>>, vector<32x32xbf16>
    %cst = arith.constant dense<0.000000e+00> : vector<8x32xf32>
    %2 = tpu.matmul %0, %1, %cst {dimension_numbers = #tpu.dot_dimension_numbers<[1], [0], [0], [1], [0, 0, 1, 1], [], []>} : vector<8x32xbf16>, vector<32x32xbf16>, vector<8x32xf32> -> vector<8x32xf32>
    %c0_3 = arith.constant 0 : index
    %c0_4 = arith.constant 0 : index
    %3 = vector.load %arg4[%c0_3, %c0_4] : memref<1x32xf32, #tpu.memory_space<vmem>>, vector<1x32xf32>
    %4 = vector.broadcast %3 : vector<1x32xf32> to vector<8x32xf32>
    %5 = arith.addf %2, %4 : vector<8x32xf32>
    %c0_5 = arith.constant 0 : index
    %c0_6 = arith.constant 0 : index
    %6 = vector.load %arg2[%c0_5, %c0_6] : memref<8x32xbf16, #tpu.memory_space<vmem>>, vector<8x32xbf16>
    %c0_7 = arith.constant 0 : index
    %c0_8 = arith.constant 0 : index
    %7 = vector.load %arg5[%c0_7, %c0_8] : memref<32x32xbf16, #tpu.memory_space<vmem>>, vector<32x32xbf16>
    %cst_9 = arith.constant dense<0.000000e+00> : vector<8x32xf32>
    %8 = tpu.matmul %6, %7, %cst_9 {dimension_numbers = #tpu.dot_dimension_numbers<[1], [0], [0], [1], [0, 0, 1, 1], [], []>} : vector<8x32xbf16>, vector<32x32xbf16>, vector<8x32xf32> -> vector<8x32xf32>
    %c0_10 = arith.constant 0 : index
    %c0_11 = arith.constant 0 : index
    %9 = vector.load %arg6[%c0_10, %c0_11] : memref<1x32xf32, #tpu.memory_space<vmem>>, vector<1x32xf32>
    %10 = vector.broadcast %9 : vector<1x32xf32> to vector<8x32xf32>
    %11 = arith.addf %8, %10 : vector<8x32xf32>
    %12 = arith.truncf %5 : vector<8x32xf32> to vector<8x32xbf16>
    %c0_12 = arith.constant 0 : index
    %c0_13 = arith.constant 0 : index
    %13 = vector.load %arg7[%c0_12, %c0_13] : memref<8x32xbf16, #tpu.memory_space<vmem>>, vector<8x32xbf16>
    tpu.vector_store %arg7[%c0_12, %c0_13], %12 {strides = array<i32>} : memref<8x32xbf16, #tpu.memory_space<vmem>>, vector<8x32xbf16>,
    %14 = arith.truncf %11 : vector<8x32xf32> to vector<8x32xbf16>
    %c0_14 = arith.constant 0 : index
    %c0_15 = arith.constant 0 : index
    %15 = vector.load %arg8[%c0_14, %c0_15] : memref<8x32xbf16, #tpu.memory_space<vmem>>, vector<8x32xbf16>
    tpu.vector_store %arg8[%c0_14, %c0_15], %14 {strides = array<i32>} : memref<8x32xbf16, #tpu.memory_space<vmem>>, vector<8x32xbf16>,
    return
  }
  func.func @transform_0(%arg0: i32) -> (i32, i32) {
    %c0_i32 = arith.constant 0 : i32
    %c0_i32_0 = arith.constant 0 : i32
    return %arg0, %c0_i32 : i32, i32
  }
  func.func @transform_1(%arg0: i32) -> (i32, i32) {
    %c0_i32 = arith.constant 0 : i32
    %c0_i32_0 = arith.constant 0 : i32
    return %arg0, %c0_i32 : i32, i32
  }
  func.func @transform_2(%arg0: i32) -> (i32, i32) {
    %c0_i32 = arith.constant 0 : i32
    %c0_i32_0 = arith.constant 0 : i32
    %c0_i32_1 = arith.constant 0 : i32
    return %c0_i32, %c0_i32_0 : i32, i32
  }
  func.func @transform_3(%arg0: i32) -> (i32, i32) {
    %c0_i32 = arith.constant 0 : i32
    %c0_i32_0 = arith.constant 0 : i32
    %c0_i32_1 = arith.constant 0 : i32
    return %c0_i32, %c0_i32_0 : i32, i32
  }
  func.func @transform_4(%arg0: i32) -> (i32, i32) {
    %c0_i32 = arith.constant 0 : i32
    %c0_i32_0 = arith.constant 0 : i32
    %c0_i32_1 = arith.constant 0 : i32
    return %c0_i32, %c0_i32_0 : i32, i32
  }
  func.func @transform_5(%arg0: i32) -> (i32, i32) {
    %c0_i32 = arith.constant 0 : i32
    %c0_i32_0 = arith.constant 0 : i32
    %c0_i32_1 = arith.constant 0 : i32
    return %c0_i32, %c0_i32_0 : i32, i32
  }
  func.func @transform_6(%arg0: i32) -> (i32, i32) {
    %c0_i32 = arith.constant 0 : i32
    %c0_i32_0 = arith.constant 0 : i32
    return %arg0, %c0_i32 : i32, i32
  }
  func.func @transform_7(%arg0: i32) -> (i32, i32) {
    %c0_i32 = arith.constant 0 : i32
    %c0_i32_0 = arith.constant 0 : i32
    return %arg0, %c0_i32 : i32, i32
  }
}

</mosaic_0001>

<llo_original>
// kernel: tpu_custom_call.1
$region0: #{tpu_custom_call.1}
  #allocation0 [shape = 'u32[]', space=smem, size = 0x4, offset = 0x4, fixed_abs, tag = 'smem constant byte address 0x4 - core index']
  #allocation1 [shape = 'u32[144,128]{1,0:T(1,128)}', space=vmem, size = 0x12000, scoped, tag = 'internal scratch']
  %s0 = inlined_call_operand.hbm [shape: bf16[8,32], index: 0, kind: input, shape index: {}]
  %s1 = inlined_call_operand.hbm [shape: bf16[8,32], index: 1, kind: input, shape index: {}]
  %s2 = inlined_call_operand.hbm [shape: bf16[32,32], index: 2, kind: input, shape index: {}]
  %s3 = inlined_call_operand.vmem [shape: f32[1,32], index: 3, kind: input, shape index: {}]
  %s4 = inlined_call_operand.hbm [shape: bf16[32,32], index: 4, kind: input, shape index: {}]
  %s5 = inlined_call_operand.vmem [shape: f32[1,32], index: 5, kind: input, shape index: {}]
  %s6 = inlined_call_operand.hbm [shape: bf16[8,32], index: 6, kind: output, shape index: {0}]
  %s7 = inlined_call_operand.hbm [shape: bf16[8,32], index: 7, kind: output, shape index: {1}]
  %8 = xla_tuple %s6, %s7
  %s9 = sld [smem:[#allocation0]]
  $region58: #{tpu_custom_call.1} parent=0
    _
  %s11 = ssub.s32 1, %s9
  %s12 = scalar_select 0, %s11, %s9
  $region1: #{tpu_custom_call.1} parent=0
    #allocation2 [shape = 'u8[2048]{0}', space=vmem, size = 0x800, scoped, tag = 'input window, operand 0, single buffered']
    #allocation3 [shape = 's32[1]{0}', space=sflag, size = 0x4, scoped, tag = 'scoped memory for tpu_custom_call.1']
    #allocation4 [shape = 's32[1]{0}', space=sflag, size = 0x4, scoped, tag = 'scoped memory for tpu_custom_call.1']
    #allocation5 [shape = 'u8[2048]{0}', space=vmem, size = 0x800, scoped, tag = 'input window, operand 1, single buffered']
    #allocation6 [shape = 's32[1]{0}', space=sflag, size = 0x4, scoped, tag = 'scoped memory for tpu_custom_call.1']
    #allocation7 [shape = 'u8[8192]{0}', space=vmem, size = 0x2000, scoped, tag = 'input window, operand 2, single buffered']
    #allocation8 [shape = 'u8[8192]{0}', space=vmem, size = 0x2000, scoped, tag = 'input window, operand 4, single buffered']
    #allocation9 [shape = 's32[1]{0}', space=sflag, size = 0x4, scoped, tag = 'scoped memory for tpu_custom_call.1']
    #allocation10 [shape = 'u8[2048]{0}', space=vmem, size = 0x800, scoped, tag = 'output window, operand 0, single buffered']
    #allocation11 [shape = 'u8[2048]{0}', space=vmem, size = 0x800, scoped, tag = 'output window, operand 1, single buffered']
    #allocation12 [shape = 's32[1]{0}', space=sflag, size = 0x4, scoped, tag = 'scoped memory for tpu_custom_call.1']
    %13 = vsyncpa [#allocation3], 0
    %14 = vsyncpa [#allocation6], 0
    %15 = vsyncpa [#allocation9], 0
    %16 = vsyncpa [#allocation4], 0
    %17 = vsyncpa [#allocation12], 0
    // Predicated region
    $region2: #{tpu_custom_call.1} parent=1 // pred_check
      _
    $region3: #{tpu_custom_call.1} parent=1 // pred_check_branch
      %19 = sbr.rel (0) target = $region5
    $region4: #{tpu_custom_call.1} parent=1 // pred_region
      %s21 = ssub.s32 64, 64
      %22 = vsyncadd [#allocation3], %s21
      %s24 = sshll.u32 [#allocation2], 4
      %s25 = int_to_ptr.vmem [resolvable:$true] %s24
      %27 = dma.hbm_to_vmem [thread:$0]  %s0, 64, %s25, [#allocation3]
    $region5: #{tpu_custom_call.1} parent=1 // pred_fallthru
      _
    // Predicated region
    $region6: #{tpu_custom_call.1} parent=1 // pred_check
      _
    $region7: #{tpu_custom_call.1} parent=1 // pred_check_branch
      %29 = sbr.rel (0) target = $region9
    $region8: #{tpu_custom_call.1} parent=1 // pred_region
      %s31 = ssub.s32 64, 64
      %32 = vsyncadd [#allocation6], %s31
      %s34 = sshll.u32 [#allocation5], 4
      %s35 = int_to_ptr.vmem [resolvable:$true] %s34
      %37 = dma.hbm_to_vmem [thread:$0]  %s1, 64, %s35, [#allocation6]
    $region9: #{tpu_custom_call.1} parent=1 // pred_fallthru
      _
    // Predicated region
    $region10: #{tpu_custom_call.1} parent=1 // pred_check
      _
    $region11: #{tpu_custom_call.1} parent=1 // pred_check_branch
      %39 = sbr.rel (0) target = $region13
    $region12: #{tpu_custom_call.1} parent=1 // pred_region
      %s41 = ssub.s32 256, 256
      %42 = vsyncadd [#allocation6], %s41
      %s43 = sshll.u32 [#allocation7], 4
      %s44 = int_to_ptr.vmem [resolvable:$true] %s43
      %49 = dma.hbm_to_vmem [thread:$0]  %s2, 256, %s44, [#allocation6], 64, 64, 4
    $region13: #{tpu_custom_call.1} parent=1 // pred_fallthru
      _
    // Predicated region
    $region14: #{tpu_custom_call.1} parent=1 // pred_check
      _
    $region15: #{tpu_custom_call.1} parent=1 // pred_check_branch
      %51 = sbr.rel (0) target = $region17
    $region16: #{tpu_custom_call.1} parent=1 // pred_region
      _
    $region17: #{tpu_custom_call.1} parent=1 // pred_fallthru
      _
    // Predicated region
    $region18: #{tpu_custom_call.1} parent=1 // pred_check
      _
    $region19: #{tpu_custom_call.1} parent=1 // pred_check_branch
      %53 = sbr.rel (0) target = $region21
    $region20: #{tpu_custom_call.1} parent=1 // pred_region
      %s55 = ssub.s32 256, 256
      %56 = vsyncadd [#allocation9], %s55
      %s57 = sshll.u32 [#allocation8], 4
      %s58 = int_to_ptr.vmem [resolvable:$true] %s57
      %63 = dma.hbm_to_vmem [thread:$0]  %s4, 256, %s58, [#allocation9], 64, 64, 4
    $region21: #{tpu_custom_call.1} parent=1 // pred_fallthru
      _
    // Predicated region
    $region22: #{tpu_custom_call.1} parent=1 // pred_check
      _
    $region23: #{tpu_custom_call.1} parent=1 // pred_check_branch
      %65 = sbr.rel (0) target = $region25
    $region24: #{tpu_custom_call.1} parent=1 // pred_region
      _
    $region25: #{tpu_custom_call.1} parent=1 // pred_fallthru
      _
    // Predicated region
    $region26: #{tpu_custom_call.1} parent=1 // pred_check
      _
    $region27: #{tpu_custom_call.1} parent=1 // pred_check_branch
      %67 = sbr.rel (0) target = $region29
    $region28: #{tpu_custom_call.1} parent=1 // pred_region
      %68 = dma.done [#allocation3], 64
    $region29: #{tpu_custom_call.1} parent=1 // pred_fallthru
      _
    // Predicated region
    $region30: #{tpu_custom_call.1} parent=1 // pred_check
      _
    $region31: #{tpu_custom_call.1} parent=1 // pred_check_branch
      %70 = sbr.rel (0) target = $region33
    $region32: #{tpu_custom_call.1} parent=1 // pred_region
      %71 = dma.done [#allocation6], 64
    $region33: #{tpu_custom_call.1} parent=1 // pred_fallthru
      _
    // Predicated region
    $region34: #{tpu_custom_call.1} parent=1 // pred_check
      _
    $region35: #{tpu_custom_call.1} parent=1 // pred_check_branch
      %73 = sbr.rel (0) target = $region37
    $region36: #{tpu_custom_call.1} parent=1 // pred_region
      %74 = dma.done [#allocation6], 256
    $region37: #{tpu_custom_call.1} parent=1 // pred_fallthru
      _
    // Predicated region
    $region38: #{tpu_custom_call.1} parent=1 // pred_check
      _
    $region39: #{tpu_custom_call.1} parent=1 // pred_check_branch
      %76 = sbr.rel (0) target = $region41
    $region40: #{tpu_custom_call.1} parent=1 // pred_region
      %77 = dma.done [#allocation9], 256
    $region41: #{tpu_custom_call.1} parent=1 // pred_fallthru
      _
    %v79 = vld [vmem:[#allocation2] sm:$0xf]
    %v80 = vld [vmem:[#allocation7] sm:$0xf]
    %v81 = vld [vmem:[#allocation7 + $0x4] sm:$0xf]
    %v82 = vld [vmem:[#allocation7 + $0x8] sm:$0xf]
    %v83 = vld [vmem:[#allocation7 + $0xc] sm:$0xf]
    %v84 = vld [vmem:[%s3] sm:$0x1]
    %v86 = vlaneseq
    %v87 = vshrl.u32 %v86, 7
    %v88 = vsub.s32 0, %v87
    %v89 = vrot.slane %v84, %v88
    %v95 = vunpack.c.l.b16 %v80
    %v96 = vunpack.c.l.b16 %v81
    %v97 = vunpack.c.l.b16 %v82
    %v98 = vunpack.c.l.b16 %v83
    %v99 = vpack.c.b16 %v96, %v95
    %v100 = vpack.c.b16 %v98, %v97
    %vm103 = vcmask 261120
    %v105 = vsel %vm103, %v79, 0
    %107 = vmatprep.subr.bf16.mxu0 0
    %108 = vmatpush1.bf16.msra.mxu0 0
    %109 = vmatprep.subr.bf16.mxu0 0
    %110 = vmatpush1.bf16.msra.mxu0 0
    %111 = vmatprep.subr.bf16.mxu0 0
    %112 = vmatpush1.bf16.msra.mxu0 0
    %113 = vmatprep.subr.bf16.mxu0 0
    %114 = vmatpush1.bf16.msra.mxu0 0
    %115 = vmatprep.subr.bf16.mxu0 0
    %116 = vmatpush1.bf16.msra.mxu0 0
    %117 = vmatprep.subr.bf16.mxu0 0
    %118 = vmatpush1.bf16.msra.mxu0 0
    %119 = vmatprep.subr.bf16.mxu0 0
    %120 = vmatpush1.bf16.msra.mxu0 %v100
    %121 = vmatprep.subr.bf16.mxu0 0
    %122 = vmatpush1.bf16.msra.mxu0 %v99
    %123 = vmatprep.subr.bf16.mxu0 0
    %124 = vmatpush2.bf16.msra.mxu0 0
    %125 = vmatprep.subr.bf16.mxu0 0
    %126 = vmatpush2.bf16.msra.mxu0 0
    %127 = vmatprep.subr.bf16.mxu0 0
    %128 = vmatpush2.bf16.msra.mxu0 0
    %129 = vmatprep.subr.bf16.mxu0 0
    %130 = vmatpush2.bf16.msra.mxu0 0
    %131 = vmatprep.subr.bf16.mxu0 0
    %132 = vmatpush2.bf16.msra.mxu0 0
    %133 = vmatprep.subr.bf16.mxu0 0
    %134 = vmatpush2.bf16.msra.mxu0 0
    %135 = vmatprep.subr.bf16.mxu0 0
    %136 = vmatpush2.bf16.msra.mxu0 0
    %137 = vmatprep.subr.bf16.mxu0 0
    %138 = vmatpush2.bf16.msra.mxu0 0
    %139 = vmatprep.mubr.bf16.mxu0 0
    %140 = vmatmul.mubr.bf16.gmra.mxu0 %v105
    %v141 = vpop.f32.mrf.mxu0
    %v142 = vadd.f32 %v89, %v141
    %v143 = vpop.f32.mrf.mxu0
    %v144 = vpop.f32.mrf.mxu0
    %v145 = vpop.f32.mrf.mxu0
    %146 = vdwg.mxu0
    %v147 = vld [vmem:[#allocation5] sm:$0xf]
    %v148 = vld [vmem:[#allocation8] sm:$0xf]
    %v149 = vld [vmem:[#allocation8 + $0x4] sm:$0xf]
    %v150 = vld [vmem:[#allocation8 + $0x8] sm:$0xf]
    %v151 = vld [vmem:[#allocation8 + $0xc] sm:$0xf]
    %v152 = vld [vmem:[%s5] sm:$0x1]
    %v154 = vlaneseq
    %v155 = vshrl.u32 %v154, 7
    %v156 = vsub.s32 0, %v155
    %v157 = vrot.slane %v152, %v156
    %v163 = vunpack.c.l.b16 %v148
    %v164 = vunpack.c.l.b16 %v149
    %v165 = vunpack.c.l.b16 %v150
    %v166 = vunpack.c.l.b16 %v151
    %v167 = vpack.c.b16 %v164, %v163
    %v168 = vpack.c.b16 %v166, %v165
    %v172 = vsel %vm103, %v147, 0
    %174 = vmatprep.subr.bf16.mxu0 0
    %175 = vmatpush1.bf16.msra.mxu0 0
    %176 = vmatprep.subr.bf16.mxu0 0
    %177 = vmatpush1.bf16.msra.mxu0 0
    %178 = vmatprep.subr.bf16.mxu0 0
    %179 = vmatpush1.bf16.msra.mxu0 0
    %180 = vmatprep.subr.bf16.mxu0 0
    %181 = vmatpush1.bf16.msra.mxu0 0
    %182 = vmatprep.subr.bf16.mxu0 0
    %183 = vmatpush1.bf16.msra.mxu0 0
    %184 = vmatprep.subr.bf16.mxu0 0
    %185 = vmatpush1.bf16.msra.mxu0 0
    %186 = vmatprep.subr.bf16.mxu0 0
    %187 = vmatpush1.bf16.msra.mxu0 %v168
    %188 = vmatprep.subr.bf16.mxu0 0
    %189 = vmatpush1.bf16.msra.mxu0 %v167
    %190 = vmatprep.subr.bf16.mxu0 0
    %191 = vmatpush2.bf16.msra.mxu0 0
    %192 = vmatprep.subr.bf16.mxu0 0
    %193 = vmatpush2.bf16.msra.mxu0 0
    %194 = vmatprep.subr.bf16.mxu0 0
    %195 = vmatpush2.bf16.msra.mxu0 0
    %196 = vmatprep.subr.bf16.mxu0 0
    %197 = vmatpush2.bf16.msra.mxu0 0
    %198 = vmatprep.subr.bf16.mxu0 0
    %199 = vmatpush2.bf16.msra.mxu0 0
    %200 = vmatprep.subr.bf16.mxu0 0
    %201 = vmatpush2.bf16.msra.mxu0 0
    %202 = vmatprep.subr.bf16.mxu0 0
    %203 = vmatpush2.bf16.msra.mxu0 0
    %204 = vmatprep.subr.bf16.mxu0 0
    %205 = vmatpush2.bf16.msra.mxu0 0
    %206 = vmatprep.mubr.bf16.mxu0 0
    %207 = vmatmul.mubr.bf16.gmra.mxu0 %v172
    %v208 = vpop.f32.mrf.mxu0
    %v209 = vadd.f32 %v157, %v208
    %v210 = vpop.f32.mrf.mxu0
    %v211 = vpop.f32.mrf.mxu0
    %v212 = vpop.f32.mrf.mxu0
    %213 = vdwg.mxu0
    %v214 = vpack.c.bf16 %v142, %v142
    %vm215 = vcmask 257024
    %216 = vst.msk [vmem:[#allocation10] sm:$0xf] %vm215, %v214
    %v217 = vpack.c.bf16 %v209, %v209
    %218 = vst.msk [vmem:[#allocation11] sm:$0xf] %vm215, %v217
    // Predicated region
    $region42: #{tpu_custom_call.1} parent=1 // pred_check
      _
    $region43: #{tpu_custom_call.1} parent=1 // pred_check_branch
      %220 = sbr.rel (0) target = $region45
    $region44: #{tpu_custom_call.1} parent=1 // pred_region
      %s222 = ssub.s32 64, 64
      %223 = vsyncadd [#allocation4], %s222
      %s225 = sshll.u32 [#allocation10], 4
      %s226 = int_to_ptr.vmem [resolvable:$true] %s225
      %228 = dma.vmem_to_hbm [thread:$0]  %s226, 64, %s6, [#allocation4]
    $region45: #{tpu_custom_call.1} parent=1 // pred_fallthru
      _
    // Predicated region
    $region46: #{tpu_custom_call.1} parent=1 // pred_check
      _
    $region47: #{tpu_custom_call.1} parent=1 // pred_check_branch
      %230 = sbr.rel (0) target = $region49
    $region48: #{tpu_custom_call.1} parent=1 // pred_region
      %s232 = ssub.s32 64, 64
      %233 = vsyncadd [#allocation12], %s232
      %s235 = sshll.u32 [#allocation11], 4
      %s236 = int_to_ptr.vmem [resolvable:$true] %s235
      %238 = dma.vmem_to_hbm [thread:$0]  %s236, 64, %s7, [#allocation12]
    $region49: #{tpu_custom_call.1} parent=1 // pred_fallthru
      _
    // Predicated region
    $region50: #{tpu_custom_call.1} parent=1 // pred_check
      _
    $region51: #{tpu_custom_call.1} parent=1 // pred_check_branch
      %240 = sbr.rel (0) target = $region53
    $region52: #{tpu_custom_call.1} parent=1 // pred_region
      %241 = dma.done [#allocation4], 64
    $region53: #{tpu_custom_call.1} parent=1 // pred_fallthru
      _
    // Predicated region
    $region54: #{tpu_custom_call.1} parent=1 // pred_check
      _
    $region55: #{tpu_custom_call.1} parent=1 // pred_check_branch
      %243 = sbr.rel (0) target = $region57
    $region56: #{tpu_custom_call.1} parent=1 // pred_region
      %244 = dma.done [#allocation12], 64
    $region57: #{tpu_custom_call.1} parent=1 // pred_fallthru
      _
    %245 = vsyncpa [#allocation3], 1
    %246 = vsyncpa [#allocation6], 1
    %247 = vsyncpa [#allocation9], 1
    %248 = vsyncpa [#allocation4], 1
    %249 = vsyncpa [#allocation12], 1

</llo_original>
